<compile_context>
chip_gen: v7x
topology: tpu7x:2x2x1
jax: 0.10.0
libtpu: 0.0.40
codegen_flags: <defaults>
</compile_context>

<pallas_src>
import functools

import jax
import jax.numpy as jnp
from jax.experimental import pallas as pl
from jax.experimental.pallas import tpu as pltpu

EPS = 1e-5


# ------------------------------ Pallas kernel --------------------------------

def _fused_resblock_kernel(x_ref, w1_ref, b1_ref, w2_ref, b2_ref, m_ref,
                           o_ref, y1_ref, st_ref, *, wp, nb):
    """Fused residual block for `nb` images.

    Layout: channels on sublanes, flattened zero-padded spatial on lanes.  A 3x3/pad-1
    conv output column j needs input column j + ky*(W+2) + kx, so every tap is a
    contiguous lane-shifted slice; the 9 taps are stacked along sublanes and contracted
    with a (Cout, 9*Cin) weight in a single MXU dot.

      x_ref : (nb, Cin, P)     zero-padded, lane-shifted flattened input (f32; residual)
      w1_ref: (Cin, 9*Cin)     conv1 weight, BN1 scale folded, tap-major columns
      b1_ref: (Cin, 1)         folded BN1 bias
      w2_ref: (Cout, 9*Cin)    conv2 weight, BN2 scale folded
      b2_ref: (Cout, 1)        folded BN2 bias
      m_ref : (1, Qp)          1.0 on image-interior columns, 0.0 on per-row borders/pad
      o_ref : (nb, Cout, Qp)   lane-dense output (junk/pad columns dropped by wrapper)
      y1_ref: (Cin, Y1W)       VMEM scratch: zero-bordered conv2 input (never hits HBM)
      st_ref: (9*Cin, Qp)      VMEM scratch: stacked 9-tap activation slab
    """
    cin = x_ref.shape[1]
    qp = o_ref.shape[2]               # lane-padded output columns
    y1w = y1_ref.shape[1]
    mdt = w1_ref.dtype                # matmul operand dtype (bf16 default, f32 opt.)

    # Zero the y1 regions conv1 never writes (top padded row + tail halo).  Done
    # unconditionally every step so it stays correct when the "parallel" grid is
    # sharded across TensorCores (each core owns its own scratch instance).
    y1_ref[:, 0:wp] = jnp.zeros((cin, wp), y1_ref.dtype)
    y1_ref[:, wp + qp:y1w] = jnp.zeros((cin, y1w - wp - qp), y1_ref.dtype)

    m = m_ref[...]                    # (1, qp) interior mask, f32

    for b in range(nb):               # static unroll over images in this grid step
        x32 = x_ref[b]                # (cin, P) f32; read once, also the residual

        # ---- conv1 (3x3, pad 1) + folded BN1 + ReLU: one K=9*Cin MXU dot ----
        for t in range(9):
            off = wp + (t // 3) * wp + (t % 3)
            st_ref[t * cin:(t + 1) * cin, :] = x32[:, off:off + qp]
        acc1 = jnp.dot(w1_ref[...], st_ref[...].astype(mdt),
                       preferred_element_type=jnp.float32)
        # Mask zeroes the per-row border columns so y1 holds exactly the zero-padded
        # conv2 input; y1 never round-trips HBM.
        y1_ref[:, wp:wp + qp] = jnp.maximum(acc1 + b1_ref[...], 0.0) * m

        # ---- conv2 (3x3, pad 1) + folded BN2 + residual + ReLU ----
        y1 = y1_ref[...]
        for t in range(9):
            off = (t // 3) * wp + (t % 3)
            st_ref[t * cin:(t + 1) * cin, :] = y1[:, off:off + qp]
        acc2 = jnp.dot(w2_ref[...], st_ref[...].astype(mdt),
                       preferred_element_type=jnp.float32)
        identity = x32[:, 2 * wp + 2:2 * wp + 2 + qp]   # f32 residual, Cout == Cin
        o_ref[b] = jnp.maximum(acc2 + b2_ref[...] + identity, 0.0).astype(o_ref.dtype)


# -------------------------------- JAX wrapper ---------------------------------

def _round_up(v, m):
    return (v + m - 1) // m * m


def _fold_bn(gamma, beta, mean, var):
    scale = gamma / jnp.sqrt(var + EPS)
    return scale, beta - mean * scale


def _fold_weight(w_oihw, scale, dtype):
    """PyTorch (Cout,Cin,3,3) * BN scale -> (Cout, 9*Cin); column (ky*3+kx)*Cin + i."""
    cout, cin = w_oihw.shape[0], w_oihw.shape[1]
    w = w_oihw * scale[:, None, None, None]                 # fold in f32
    w = jnp.transpose(w, (0, 2, 3, 1)).reshape(cout, 9 * cin)
    return w.astype(dtype)                                  # cast only at the end


def _images_per_step(n):
    """Largest divisor <= 8 of n that still leaves a grid of length >= 2 (megacore)."""
    best = 1
    for cand in range(2, 9):
        if n % cand == 0 and n // cand >= 2:
            best = cand
    return best


@functools.partial(jax.jit, static_argnames=("matmul_dtype",))
def trans_spatial_residual_block(x_nchw, params, matmul_dtype=jnp.bfloat16):
    """Forward of TransSpatialResidualBlock (stride=1, upsample=None). NCHW in/out."""
    x = x_nchw.astype(jnp.float32)
    N, cin, H, W = x.shape
    cout = params["w2"].shape[0]
    assert cout == cin, "upsample=None residual add requires out_planes == in_planes"

    wp = W + 2                              # padded row width
    q = H * wp                              # real output columns (2 junk cols per row)
    qp = _round_up(q, 128)                  # lane-dense output columns
    y1w = _round_up(qp + 2 * wp + 2, 128)   # zero-bordered conv2-input scratch width
    p = _round_up(3 * wp + 2 + qp, 128)     # lane-padded input columns
    nb = _images_per_step(N)                # images per grid step

    s1, b1 = _fold_bn(params["gamma1"], params["beta1"], params["mean1"], params["var1"])
    s2, b2 = _fold_bn(params["gamma2"], params["beta2"], params["mean2"], params["var2"])
    w1f = _fold_weight(params["w1"], s1, matmul_dtype)
    w2f = _fold_weight(params["w2"], s2, matmul_dtype)
    b1c = b1.reshape(cin, 1).astype(jnp.float32)
    b2c = b2.reshape(cout, 1).astype(jnp.float32)

    # Zero-pad (SAME, pad=1), flatten spatial onto the lane axis, shift right by wp+1
    # so every conv1 tap slice is in-bounds.
    xpad = jnp.pad(x, ((0, 0), (0, 0), (1, 1), (1, 1))).reshape(N, cin, (H + 2) * wp)
    xb = jnp.pad(xpad, ((0, 0), (0, 0),
                        (wp + 1, p - (H + 2) * wp - (wp + 1))))
    # TODO(synk): this pad/reshape and the final junk-column drop are extra XLA HBM
    #             passes; for large images feed the raw NCHW tensor via pl.ANY and DMA
    #             rows into a pre-zeroed VMEM slab inside the kernel.

    # Mask over the qp computed columns: 1 exactly on image-interior positions of the
    # padded grid (so masked y1 becomes conv2's zero-padded input), 0 elsewhere.
    jj = jnp.arange(qp)
    c = jj + wp
    hp, wq = c // wp, c % wp
    mask = ((hp >= 1) & (hp <= H) & (wq >= 1) & (wq <= W)).astype(jnp.float32)
    mask = mask.reshape(1, qp)

    kernel = functools.partial(_fused_resblock_kernel, wp=wp, nb=nb)
    out_flat = pl.pallas_call(
        kernel,
        out_shape=jax.ShapeDtypeStruct((N, cout, qp), jnp.float32),
        grid=(N // nb,),
        in_specs=[
            pl.BlockSpec((nb, cin, p), lambda n: (n, 0, 0)),
            pl.BlockSpec((cin, 9 * cin), lambda n: (0, 0)),
            pl.BlockSpec((cin, 1), lambda n: (0, 0)),
            pl.BlockSpec((cout, 9 * cin), lambda n: (0, 0)),
            pl.BlockSpec((cout, 1), lambda n: (0, 0)),
            pl.BlockSpec((1, qp), lambda n: (0, 0)),
        ],
        out_specs=pl.BlockSpec((nb, cout, qp), lambda n: (n, 0, 0)),
        scratch_shapes=[pltpu.VMEM((cin, y1w), jnp.float32),
                        pltpu.VMEM((9 * cin, qp), jnp.float32)],
        compiler_params=pltpu.CompilerParams(
            dimension_semantics=("parallel",),
            vmem_limit_bytes=48 * 1024 * 1024),
    )(xb, w1f, b1c, w2f, b2c, mask)

    # Drop the lane pad and the 2 junk columns per image row; result is NCHW.
    return out_flat[:, :, :q].reshape(N, cout, H, wp)[:, :, :, :W]


# ----------------------------- pure-JAX reference ------------------------------

def _ref_forward(x_nchw, params):
    def conv3x3(x, w):
        return jax.lax.conv_general_dilated(
            x, w, window_strides=(1, 1), padding="SAME",
            dimension_numbers=("NCHW", "OIHW", "NCHW"))

    def bn(x, g, beta, m, v):
        s = g / jnp.sqrt(v + EPS)
        return x * s[None, :, None, None] + (beta - m * s)[None, :, None, None]

    out = conv3x3(x_nchw, params["w1"])
    out = jax.nn.relu(bn(out, params["gamma1"], params["beta1"],
                         params["mean1"], params["var1"]))
    out = conv3x3(out, params["w2"])
    out = bn(out, params["gamma2"], params["beta2"],
             params["mean2"], params["var2"])
    return jax.nn.relu(out + x_nchw)


# ------------------------------------ main --------------------------------------

if __name__ == "__main__":
    in_planes = 4
    out_planes = 4      # residual add requires in_planes == out_planes (upsample=None)
    N, H, W = 2, 16, 16

    key = jax.random.PRNGKey(0)
    keys = jax.random.split(key, 11)

    params = {
        # conv3x3 weights, PyTorch layout (Cout, Cin, 3, 3), bias=False
        "w1": 0.1 * jax.random.normal(keys[0], (in_planes, in_planes, 3, 3), jnp.float32),
        "w2": 0.1 * jax.random.normal(keys[1], (out_planes, in_planes, 3, 3), jnp.float32),
        # BatchNorm2d params (inference mode: running stats)
        "gamma1": 1.0 + 0.1 * jax.random.normal(keys[2], (in_planes,), jnp.float32),
        "beta1": 0.1 * jax.random.normal(keys[3], (in_planes,), jnp.float32),
        "mean1": 0.1 * jax.random.normal(keys[4], (in_planes,), jnp.float32),
        "var1": jax.random.uniform(keys[5], (in_planes,), jnp.float32, 0.5, 1.5),
        "gamma2": 1.0 + 0.1 * jax.random.normal(keys[6], (out_planes,), jnp.float32),
        "beta2": 0.1 * jax.random.normal(keys[7], (out_planes,), jnp.float32),
        "mean2": 0.1 * jax.random.normal(keys[8], (out_planes,), jnp.float32),
        "var2": jax.random.uniform(keys[9], (out_planes,), jnp.float32, 0.5, 1.5),
    }

    x = jax.random.normal(keys[10], (N, in_planes, H, W), jnp.float32)

    ref = jax.block_until_ready(_ref_forward(x, params))

    # f32-operand MXU path: tight tolerance vs the XLA f32 reference.
    out_f32 = jax.block_until_ready(
        trans_spatial_residual_block(x, params, matmul_dtype=jnp.float32))
    assert out_f32.shape == (N, out_planes, H, W), out_f32.shape
    assert jnp.allclose(out_f32, ref, atol=1e-3, rtol=1e-3), (
        float(jnp.max(jnp.abs(out_f32 - ref))))

    # Default bf16-operand path (f32 accumulate + f32 epilogue): looser tolerance.
    out_bf16 = jax.block_until_ready(trans_spatial_residual_block(x, params))
    assert out_bf16.shape == (N, out_planes, H, W), out_bf16.shape
    assert jnp.allclose(out_bf16, ref, atol=3e-2, rtol=3e-2), (
        float(jnp.max(jnp.abs(out_bf16 - ref))))

    print("KERNEL_OK")
</pallas_src>

<mosaic_0001>
module attributes {stable_mosaic.version = 11 : i64} {
  func.func @_fused_resblock_kernel(%arg0: i32, %arg1: memref<1x4x512xf32, #tpu.memory_space<vmem>>, %arg2: memref<4x36xf32, #tpu.memory_space<vmem>>, %arg3: memref<4x1xf32, #tpu.memory_space<vmem>>, %arg4: memref<4x36xf32, #tpu.memory_space<vmem>>, %arg5: memref<4x1xf32, #tpu.memory_space<vmem>>, %arg6: memref<1x384xf32, #tpu.memory_space<vmem>>, %arg7: memref<1x4x384xf32, #tpu.memory_space<vmem>>, %arg8: memref<4x512xf32, #tpu.memory_space<vmem>>, %arg9: memref<36x384xf32, #tpu.memory_space<vmem>>) attributes {dimension_semantics = [#tpu.dimension_semantics<parallel>], iteration_bounds = array<i64: 2>, scalar_prefetch = 0 : i64, scratch_operands = 2 : i64, tpu.core_type = #tpu.core_type<tc>, window_params = [{transform_indices = @transform_0, window_bounds = array<i64: 1, 4, 512>}, {pipeline_mode = #tpu.pipeline_mode<synchronous>, transform_indices = @transform_1, window_bounds = array<i64: 4, 36>}, {pipeline_mode = #tpu.pipeline_mode<synchronous>, transform_indices = @transform_2, window_bounds = array<i64: 4, 1>}, {pipeline_mode = #tpu.pipeline_mode<synchronous>, transform_indices = @transform_3, window_bounds = array<i64: 4, 36>}, {pipeline_mode = #tpu.pipeline_mode<synchronous>, transform_indices = @transform_4, window_bounds = array<i64: 4, 1>}, {pipeline_mode = #tpu.pipeline_mode<synchronous>, transform_indices = @transform_5, window_bounds = array<i64: 1, 384>}, {transform_indices = @transform_6, window_bounds = array<i64: 1, 4, 384>}]} {
    %cst = arith.constant 0.000000e+00 : f32
    %0 = vector.broadcast %cst : f32 to vector<4x18xf32>
    %c0 = arith.constant 0 : index
    %c0_0 = arith.constant 0 : index
    %1 = vector.load %arg8[%c0, %c0_0] : memref<4x512xf32, #tpu.memory_space<vmem>>, vector<4x18xf32>
    tpu.vector_store %arg8[%c0, %c0_0], %0 {strides = array<i32>} : memref<4x512xf32, #tpu.memory_space<vmem>>, vector<4x18xf32>,
    %cst_1 = arith.constant 0.000000e+00 : f32
    %2 = vector.broadcast %cst_1 : f32 to vector<4x110xf32>
    %c0_2 = arith.constant 0 : index
    %c402 = arith.constant 402 : index
    %3 = vector.load %arg8[%c0_2, %c402] : memref<4x512xf32, #tpu.memory_space<vmem>>, vector<4x110xf32>
    tpu.vector_store %arg8[%c0_2, %c402], %2 {strides = array<i32>} : memref<4x512xf32, #tpu.memory_space<vmem>>, vector<4x110xf32>,
    %c0_3 = arith.constant 0 : index
    %c0_4 = arith.constant 0 : index
    %4 = vector.load %arg6[%c0_3, %c0_4] : memref<1x384xf32, #tpu.memory_space<vmem>>, vector<1x384xf32>
    %c0_5 = arith.constant 0 : index
    %c0_6 = arith.constant 0 : index
    %c0_7 = arith.constant 0 : index
    %5 = vector.load %arg1[%c0_5, %c0_6, %c0_7] : memref<1x4x512xf32, #tpu.memory_space<vmem>>, vector<1x4x512xf32>
    %6 = vector.shape_cast %5 : vector<1x4x512xf32> to vector<4x512xf32>
    %7 = vector.extract_strided_slice %6 {offsets = [0, 18], sizes = [4, 384], strides = [1, 1]} : vector<4x512xf32> to vector<4x384xf32>
    %c0_8 = arith.constant 0 : index
    %c0_9 = arith.constant 0 : index
    %8 = vector.load %arg9[%c0_8, %c0_9] : memref<36x384xf32, #tpu.memory_space<vmem>>, vector<4x384xf32>
    tpu.vector_store %arg9[%c0_8, %c0_9], %7 {strides = array<i32>} : memref<36x384xf32, #tpu.memory_space<vmem>>, vector<4x384xf32>,
    %9 = vector.extract_strided_slice %6 {offsets = [0, 19], sizes = [4, 384], strides = [1, 1]} : vector<4x512xf32> to vector<4x384xf32>
    %c4 = arith.constant 4 : index
    %c0_10 = arith.constant 0 : index
    %10 = vector.load %arg9[%c4, %c0_10] : memref<36x384xf32, #tpu.memory_space<vmem>>, vector<4x384xf32>
    tpu.vector_store %arg9[%c4, %c0_10], %9 {strides = array<i32>} : memref<36x384xf32, #tpu.memory_space<vmem>>, vector<4x384xf32>,
    %11 = vector.extract_strided_slice %6 {offsets = [0, 20], sizes = [4, 384], strides = [1, 1]} : vector<4x512xf32> to vector<4x384xf32>
    %c8 = arith.constant 8 : index
    %c0_11 = arith.constant 0 : index
    %12 = vector.load %arg9[%c8, %c0_11] : memref<36x384xf32, #tpu.memory_space<vmem>>, vector<4x384xf32>
    tpu.vector_store %arg9[%c8, %c0_11], %11 {strides = array<i32>} : memref<36x384xf32, #tpu.memory_space<vmem>>, vector<4x384xf32>,
    %13 = vector.extract_strided_slice %6 {offsets = [0, 36], sizes = [4, 384], strides = [1, 1]} : vector<4x512xf32> to vector<4x384xf32>
    %c12 = arith.constant 12 : index
    %c0_12 = arith.constant 0 : index
    %14 = vector.load %arg9[%c12, %c0_12] : memref<36x384xf32, #tpu.memory_space<vmem>>, vector<4x384xf32>
    tpu.vector_store %arg9[%c12, %c0_12], %13 {strides = array<i32>} : memref<36x384xf32, #tpu.memory_space<vmem>>, vector<4x384xf32>,
    %15 = vector.extract_strided_slice %6 {offsets = [0, 37], sizes = [4, 384], strides = [1, 1]} : vector<4x512xf32> to vector<4x384xf32>
    %c16 = arith.constant 16 : index
    %c0_13 = arith.constant 0 : index
    %16 = vector.load %arg9[%c16, %c0_13] : memref<36x384xf32, #tpu.memory_space<vmem>>, vector<4x384xf32>
    tpu.vector_store %arg9[%c16, %c0_13], %15 {strides = array<i32>} : memref<36x384xf32, #tpu.memory_space<vmem>>, vector<4x384xf32>,
    %17 = vector.extract_strided_slice %6 {offsets = [0, 38], sizes = [4, 384], strides = [1, 1]} : vector<4x512xf32> to vector<4x384xf32>
    %c20 = arith.constant 20 : index
    %c0_14 = arith.constant 0 : index
    %18 = vector.load %arg9[%c20, %c0_14] : memref<36x384xf32, #tpu.memory_space<vmem>>, vector<4x384xf32>
    tpu.vector_store %arg9[%c20, %c0_14], %17 {strides = array<i32>} : memref<36x384xf32, #tpu.memory_space<vmem>>, vector<4x384xf32>,
    %19 = vector.extract_strided_slice %6 {offsets = [0, 54], sizes = [4, 384], strides = [1, 1]} : vector<4x512xf32> to vector<4x384xf32>
    %c24 = arith.constant 24 : index
    %c0_15 = arith.constant 0 : index
    %20 = vector.load %arg9[%c24, %c0_15] : memref<36x384xf32, #tpu.memory_space<vmem>>, vector<4x384xf32>
    tpu.vector_store %arg9[%c24, %c0_15], %19 {strides = array<i32>} : memref<36x384xf32, #tpu.memory_space<vmem>>, vector<4x384xf32>,
    %21 = vector.extract_strided_slice %6 {offsets = [0, 55], sizes = [4, 384], strides = [1, 1]} : vector<4x512xf32> to vector<4x384xf32>
    %c28 = arith.constant 28 : index
    %c0_16 = arith.constant 0 : index
    %22 = vector.load %arg9[%c28, %c0_16] : memref<36x384xf32, #tpu.memory_space<vmem>>, vector<4x384xf32>
    tpu.vector_store %arg9[%c28, %c0_16], %21 {strides = array<i32>} : memref<36x384xf32, #tpu.memory_space<vmem>>, vector<4x384xf32>,
    %23 = vector.extract_strided_slice %6 {offsets = [0, 56], sizes = [4, 384], strides = [1, 1]} : vector<4x512xf32> to vector<4x384xf32>
    %c32 = arith.constant 32 : index
    %c0_17 = arith.constant 0 : index
    %24 = vector.load %arg9[%c32, %c0_17] : memref<36x384xf32, #tpu.memory_space<vmem>>, vector<4x384xf32>
    tpu.vector_store %arg9[%c32, %c0_17], %23 {strides = array<i32>} : memref<36x384xf32, #tpu.memory_space<vmem>>, vector<4x384xf32>,
    %c0_18 = arith.constant 0 : index
    %c0_19 = arith.constant 0 : index
    %25 = vector.load %arg2[%c0_18, %c0_19] : memref<4x36xf32, #tpu.memory_space<vmem>>, vector<4x36xf32>
    %c0_20 = arith.constant 0 : index
    %c0_21 = arith.constant 0 : index
    %26 = vector.load %arg9[%c0_20, %c0_21] : memref<36x384xf32, #tpu.memory_space<vmem>>, vector<36x384xf32>
    %cst_22 = arith.constant dense<0.000000e+00> : vector<4x384xf32>
    %27 = tpu.matmul %25, %26, %cst_22 {dimension_numbers = #tpu.dot_dimension_numbers<[1], [0], [0], [1], [0, 0, 1, 1], [], []>} : vector<4x36xf32>, vector<36x384xf32>, vector<4x384xf32> -> vector<4x384xf32>
    %c0_23 = arith.constant 0 : index
    %c0_24 = arith.constant 0 : index
    %28 = vector.load %arg3[%c0_23, %c0_24] : memref<4x1xf32, #tpu.memory_space<vmem>>, vector<4x1xf32>
    %29 = vector.broadcast %28 : vector<4x1xf32> to vector<4x384xf32>
    %30 = arith.addf %27, %29 : vector<4x384xf32>
    %cst_25 = arith.constant 0.000000e+00 : f32
    %31 = vector.broadcast %cst_25 : f32 to vector<4x384xf32>
    %32 = arith.maximumf %30, %31 : vector<4x384xf32>
    %33 = vector.broadcast %4 : vector<1x384xf32> to vector<4x384xf32>
    %34 = arith.mulf %32, %33 : vector<4x384xf32>
    %c0_26 = arith.constant 0 : index
    %c18 = arith.constant 18 : index
    %35 = vector.load %arg8[%c0_26, %c18] : memref<4x512xf32, #tpu.memory_space<vmem>>, vector<4x384xf32>
    tpu.vector_store %arg8[%c0_26, %c18], %34 {strides = array<i32>} : memref<4x512xf32, #tpu.memory_space<vmem>>, vector<4x384xf32>,
    %c0_27 = arith.constant 0 : index
    %c0_28 = arith.constant 0 : index
    %36 = vector.load %arg8[%c0_27, %c0_28] : memref<4x512xf32, #tpu.memory_space<vmem>>, vector<4x512xf32>
    %37 = vector.extract_strided_slice %36 {offsets = [0, 0], sizes = [4, 384], strides = [1, 1]} : vector<4x512xf32> to vector<4x384xf32>
    %c0_29 = arith.constant 0 : index
    %c0_30 = arith.constant 0 : index
    %38 = vector.load %arg9[%c0_29, %c0_30] : memref<36x384xf32, #tpu.memory_space<vmem>>, vector<4x384xf32>
    tpu.vector_store %arg9[%c0_29, %c0_30], %37 {strides = array<i32>} : memref<36x384xf32, #tpu.memory_space<vmem>>, vector<4x384xf32>,
    %39 = vector.extract_strided_slice %36 {offsets = [0, 1], sizes = [4, 384], strides = [1, 1]} : vector<4x512xf32> to vector<4x384xf32>
    %c4_31 = arith.constant 4 : index
    %c0_32 = arith.constant 0 : index
    %40 = vector.load %arg9[%c4_31, %c0_32] : memref<36x384xf32, #tpu.memory_space<vmem>>, vector<4x384xf32>
    tpu.vector_store %arg9[%c4_31, %c0_32], %39 {strides = array<i32>} : memref<36x384xf32, #tpu.memory_space<vmem>>, vector<4x384xf32>,
    %41 = vector.extract_strided_slice %36 {offsets = [0, 2], sizes = [4, 384], strides = [1, 1]} : vector<4x512xf32> to vector<4x384xf32>
    %c8_33 = arith.constant 8 : index
    %c0_34 = arith.constant 0 : index
    %42 = vector.load %arg9[%c8_33, %c0_34] : memref<36x384xf32, #tpu.memory_space<vmem>>, vector<4x384xf32>
    tpu.vector_store %arg9[%c8_33, %c0_34], %41 {strides = array<i32>} : memref<36x384xf32, #tpu.memory_space<vmem>>, vector<4x384xf32>,
    %43 = vector.extract_strided_slice %36 {offsets = [0, 18], sizes = [4, 384], strides = [1, 1]} : vector<4x512xf32> to vector<4x384xf32>
    %c12_35 = arith.constant 12 : index
    %c0_36 = arith.constant 0 : index
    %44 = vector.load %arg9[%c12_35, %c0_36] : memref<36x384xf32, #tpu.memory_space<vmem>>, vector<4x384xf32>
    tpu.vector_store %arg9[%c12_35, %c0_36], %43 {strides = array<i32>} : memref<36x384xf32, #tpu.memory_space<vmem>>, vector<4x384xf32>,
    %45 = vector.extract_strided_slice %36 {offsets = [0, 19], sizes = [4, 384], strides = [1, 1]} : vector<4x512xf32> to vector<4x384xf32>
    %c16_37 = arith.constant 16 : index
    %c0_38 = arith.constant 0 : index
    %46 = vector.load %arg9[%c16_37, %c0_38] : memref<36x384xf32, #tpu.memory_space<vmem>>, vector<4x384xf32>
    tpu.vector_store %arg9[%c16_37, %c0_38], %45 {strides = array<i32>} : memref<36x384xf32, #tpu.memory_space<vmem>>, vector<4x384xf32>,
    %47 = vector.extract_strided_slice %36 {offsets = [0, 20], sizes = [4, 384], strides = [1, 1]} : vector<4x512xf32> to vector<4x384xf32>
    %c20_39 = arith.constant 20 : index
    %c0_40 = arith.constant 0 : index
    %48 = vector.load %arg9[%c20_39, %c0_40] : memref<36x384xf32, #tpu.memory_space<vmem>>, vector<4x384xf32>
    tpu.vector_store %arg9[%c20_39, %c0_40], %47 {strides = array<i32>} : memref<36x384xf32, #tpu.memory_space<vmem>>, vector<4x384xf32>,
    %49 = vector.extract_strided_slice %36 {offsets = [0, 36], sizes = [4, 384], strides = [1, 1]} : vector<4x512xf32> to vector<4x384xf32>
    %c24_41 = arith.constant 24 : index
    %c0_42 = arith.constant 0 : index
    %50 = vector.load %arg9[%c24_41, %c0_42] : memref<36x384xf32, #tpu.memory_space<vmem>>, vector<4x384xf32>
    tpu.vector_store %arg9[%c24_41, %c0_42], %49 {strides = array<i32>} : memref<36x384xf32, #tpu.memory_space<vmem>>, vector<4x384xf32>,
    %51 = vector.extract_strided_slice %36 {offsets = [0, 37], sizes = [4, 384], strides = [1, 1]} : vector<4x512xf32> to vector<4x384xf32>
    %c28_43 = arith.constant 28 : index
    %c0_44 = arith.constant 0 : index
    %52 = vector.load %arg9[%c28_43, %c0_44] : memref<36x384xf32, #tpu.memory_space<vmem>>, vector<4x384xf32>
    tpu.vector_store %arg9[%c28_43, %c0_44], %51 {strides = array<i32>} : memref<36x384xf32, #tpu.memory_space<vmem>>, vector<4x384xf32>,
    %53 = vector.extract_strided_slice %36 {offsets = [0, 38], sizes = [4, 384], strides = [1, 1]} : vector<4x512xf32> to vector<4x384xf32>
    %c32_45 = arith.constant 32 : index
    %c0_46 = arith.constant 0 : index
    %54 = vector.load %arg9[%c32_45, %c0_46] : memref<36x384xf32, #tpu.memory_space<vmem>>, vector<4x384xf32>
    tpu.vector_store %arg9[%c32_45, %c0_46], %53 {strides = array<i32>} : memref<36x384xf32, #tpu.memory_space<vmem>>, vector<4x384xf32>,
    %c0_47 = arith.constant 0 : index
    %c0_48 = arith.constant 0 : index
    %55 = vector.load %arg4[%c0_47, %c0_48] : memref<4x36xf32, #tpu.memory_space<vmem>>, vector<4x36xf32>
    %c0_49 = arith.constant 0 : index
    %c0_50 = arith.constant 0 : index
    %56 = vector.load %arg9[%c0_49, %c0_50] : memref<36x384xf32, #tpu.memory_space<vmem>>, vector<36x384xf32>
    %cst_51 = arith.constant dense<0.000000e+00> : vector<4x384xf32>
    %57 = tpu.matmul %55, %56, %cst_51 {dimension_numbers = #tpu.dot_dimension_numbers<[1], [0], [0], [1], [0, 0, 1, 1], [], []>} : vector<4x36xf32>, vector<36x384xf32>, vector<4x384xf32> -> vector<4x384xf32>
    %58 = vector.extract_strided_slice %6 {offsets = [0, 38], sizes = [4, 384], strides = [1, 1]} : vector<4x512xf32> to vector<4x384xf32>
    %c0_52 = arith.constant 0 : index
    %c0_53 = arith.constant 0 : index
    %59 = vector.load %arg5[%c0_52, %c0_53] : memref<4x1xf32, #tpu.memory_space<vmem>>, vector<4x1xf32>
    %60 = vector.broadcast %59 : vector<4x1xf32> to vector<4x384xf32>
    %61 = arith.addf %57, %60 : vector<4x384xf32>
    %62 = arith.addf %61, %58 : vector<4x384xf32>
    %cst_54 = arith.constant 0.000000e+00 : f32
    %63 = vector.broadcast %cst_54 : f32 to vector<4x384xf32>
    %64 = arith.maximumf %62, %63 : vector<4x384xf32>
    %c0_55 = arith.constant 0 : index
    %c0_56 = arith.constant 0 : index
    %c0_57 = arith.constant 0 : index
    %65 = vector.load %arg7[%c0_55, %c0_56, %c0_57] : memref<1x4x384xf32, #tpu.memory_space<vmem>>, vector<1x4x384xf32>
    %66 = vector.shape_cast %65 : vector<1x4x384xf32> to vector<4x384xf32>
    %67 = vector.shape_cast %64 : vector<4x384xf32> to vector<1x4x384xf32>
    tpu.vector_store %arg7[%c0_55, %c0_56, %c0_57], %67 {strides = array<i32>} : memref<1x4x384xf32, #tpu.memory_space<vmem>>, vector<1x4x384xf32>,
    return
  }
  func.func @transform_0(%arg0: i32) -> (i32, i32, i32) {
    %c0_i32 = arith.constant 0 : i32
    %c0_i32_0 = arith.constant 0 : i32
    %c0_i32_1 = arith.constant 0 : i32
    return %arg0, %c0_i32, %c0_i32_0 : i32, i32, i32
  }
  func.func @transform_1(%arg0: i32) -> (i32, i32) {
    %c0_i32 = arith.constant 0 : i32
    %c0_i32_0 = arith.constant 0 : i32
    %c0_i32_1 = arith.constant 0 : i32
    return %c0_i32, %c0_i32_0 : i32, i32
  }
  func.func @transform_2(%arg0: i32) -> (i32, i32) {
    %c0_i32 = arith.constant 0 : i32
    %c0_i32_0 = arith.constant 0 : i32
    %c0_i32_1 = arith.constant 0 : i32
    return %c0_i32, %c0_i32_0 : i32, i32
  }
  func.func @transform_3(%arg0: i32) -> (i32, i32) {
    %c0_i32 = arith.constant 0 : i32
    %c0_i32_0 = arith.constant 0 : i32
    %c0_i32_1 = arith.constant 0 : i32
    return %c0_i32, %c0_i32_0 : i32, i32
  }
  func.func @transform_4(%arg0: i32) -> (i32, i32) {
    %c0_i32 = arith.constant 0 : i32
    %c0_i32_0 = arith.constant 0 : i32
    %c0_i32_1 = arith.constant 0 : i32
    return %c0_i32, %c0_i32_0 : i32, i32
  }
  func.func @transform_5(%arg0: i32) -> (i32, i32) {
    %c0_i32 = arith.constant 0 : i32
    %c0_i32_0 = arith.constant 0 : i32
    %c0_i32_1 = arith.constant 0 : i32
    return %c0_i32, %c0_i32_0 : i32, i32
  }
  func.func @transform_6(%arg0: i32) -> (i32, i32, i32) {
    %c0_i32 = arith.constant 0 : i32
    %c0_i32_0 = arith.constant 0 : i32
    %c0_i32_1 = arith.constant 0 : i32
    return %arg0, %c0_i32, %c0_i32_0 : i32, i32, i32
  }
}

</mosaic_0001>

<llo_original>
// kernel: trans_spatial_residual_block.1
$region0: #{trans_spatial_residual_block.1}
  #allocation0 [shape = 'u32[]', space=smem, size = 0x4, offset = 0x4, fixed_abs, tag = 'smem constant byte address 0x4 - core index']
  #allocation1 [shape = 'u32[144,128]{1,0:T(1,128)}', space=vmem, size = 0x12000, scoped, tag = 'internal scratch']
  #allocation2 [shape = 'f32[4,512]{1,0:T(4,128)}', space=vmem, size = 0x2000, scoped, tag = 'scratch operand']
  #allocation3 [shape = 'f32[36,384]{1,0:T(8,128)}', space=vmem, size = 0xf000, scoped, tag = 'scratch operand']
  %s0 = inlined_call_operand.vmem [shape: f32[2,4,512], index: 0, kind: input, shape index: {}]
  %s1 = inlined_call_operand.vmem [shape: f32[4,36], index: 1, kind: input, shape index: {}]
  %s2 = inlined_call_operand.vmem [shape: f32[4,1], index: 2, kind: input, shape index: {}]
  %s3 = inlined_call_operand.vmem [shape: f32[4,36], index: 3, kind: input, shape index: {}]
  %s4 = inlined_call_operand.vmem [shape: f32[4,1], index: 4, kind: input, shape index: {}]
  %s5 = inlined_call_operand.vmem [shape: f32[1,384], index: 5, kind: input, shape index: {}]
  %s6 = inlined_call_operand.vmem [shape: f32[2,4,384], index: 6, kind: output, shape index: {}]
  %s7 = sld [smem:[#allocation0]]
  $region57: #{trans_spatial_residual_block.1} parent=0
    _
  %s9 = ssub.s32 1, %s7
  %s10 = scalar_select 0, %s9, %s7
  loop: start=0, step=1, limit=4
  $region2: #{trans_spatial_residual_block.1} parent=0 // loop_pre_header
    _
  $region3: #{trans_spatial_residual_block.1} parent=0 // loop_header
    %s12 = sphi 0, %s16
    %p13 = scmp.ge.s32.totalorder %s12, 4
    %s22 = sphi 0, %s24
    %s25 = sphi 0, %s22
    %s26 = sphi 0, %s25
    %s42 = sphi 0, %s26
    %s46 = sphi 0, %s46
    %s48 = sphi 0, %s46
    %s49 = sphi 0, %s48
    %s63 = sphi 0, %s49
    %s67 = sphi 0, %s67
    %s69 = sphi 0, %s67
    %s70 = sphi 0, %s69
    %s84 = sphi 0, %s70
    %s88 = sphi 0, %s88
    %s90 = sphi 0, %s88
    %s91 = sphi 0, %s90
    %s105 = sphi 0, %s91
    %s109 = sphi 0, %s109
    %s111 = sphi 0, %s109
    %s112 = sphi 0, %s111
    %s126 = sphi 0, %s112
    %s130 = sphi 0, %s130
    %s132 = sphi 0, %s130
    %s133 = sphi 0, %s132
    %s147 = sphi 0, %s133
    %s153 = sphi 0, %s155
    %s156 = sphi 0, %s153
    %s157 = sphi 0, %s156
    %s173 = sphi 0, %s157
  $region4: #{trans_spatial_residual_block.1} parent=0 // loop_header_branch
    %15 = sbr.rel (%p13) target = $region8
  $region5: #{trans_spatial_residual_block.1} parent=0 // loop_body
    %s17 = ssub.s32 %s12, 1
    %s18 = ssub.s32 %s12, 2
    %s19 = sadd.s32 %s12, 1
    %s20 = ssub.s32 %s12, %s19
    %p21 = scmp.eq.s32.totalorder %s20, 0
    %s23 = sadd.s32 %s22, 1
    %s24 = scalar_select %p21, %s22, %s23
    %p27 = pneg %p21
    %p28 = scmp.eq.s32.totalorder %s12, 1
    %p29 = por %p27, %p28
    %p30 = scmp.ne.s32.totalorder %s22, %s25
    %p31 = scmp.eq.s32.totalorder %s12, 0
    %p32 = por %p30, %p31
    %p33 = scmp.ne.s32.totalorder %s22, %s25
    %p34 = scmp.eq.s32.totalorder %s17, 1
    %p35 = por %p33, %p34
    %p36 = scmp.ne.s32.totalorder %s25, %s26
    %p37 = scmp.eq.s32.totalorder %s17, 0
    %p38 = por %p36, %p37
    %p39 = scmp.ne.s32.totalorder %s25, %s26
    %p40 = scmp.eq.s32.totalorder %s18, 1
    %p41 = por %p39, %p40
    %p43 = scmp.ne.s32.totalorder %s26, %s42
    %p44 = scmp.eq.s32.totalorder %s18, 0
    %p45 = por %p43, %p44
    %s47 = sadd.s32 %s46, 1
    %p50 = scmp.eq.s32.totalorder %s12, 1
    %p51 = scmp.ne.s32.totalorder %s46, %s48
    %p52 = scmp.eq.s32.totalorder %s12, 0
    %p53 = por %p51, %p52
    %p54 = scmp.ne.s32.totalorder %s46, %s48
    %p55 = scmp.eq.s32.totalorder %s17, 1
    %p56 = por %p54, %p55
    %p57 = scmp.ne.s32.totalorder %s48, %s49
    %p58 = scmp.eq.s32.totalorder %s17, 0
    %p59 = por %p57, %p58
    %p60 = scmp.ne.s32.totalorder %s48, %s49
    %p61 = scmp.eq.s32.totalorder %s18, 1
    %p62 = por %p60, %p61
    %p64 = scmp.ne.s32.totalorder %s49, %s63
    %p65 = scmp.eq.s32.totalorder %s18, 0
    %p66 = por %p64, %p65
    %s68 = sadd.s32 %s67, 1
    %p71 = scmp.eq.s32.totalorder %s12, 1
    %p72 = scmp.ne.s32.totalorder %s67, %s69
    %p73 = scmp.eq.s32.totalorder %s12, 0
    %p74 = por %p72, %p73
    %p75 = scmp.ne.s32.totalorder %s67, %s69
    %p76 = scmp.eq.s32.totalorder %s17, 1
    %p77 = por %p75, %p76
    %p78 = scmp.ne.s32.totalorder %s69, %s70
    %p79 = scmp.eq.s32.totalorder %s17, 0
    %p80 = por %p78, %p79
    %p81 = scmp.ne.s32.totalorder %s69, %s70
    %p82 = scmp.eq.s32.totalorder %s18, 1
    %p83 = por %p81, %p82
    %p85 = scmp.ne.s32.totalorder %s70, %s84
    %p86 = scmp.eq.s32.totalorder %s18, 0
    %p87 = por %p85, %p86
    %s89 = sadd.s32 %s88, 1
    %p92 = scmp.eq.s32.totalorder %s12, 1
    %p93 = scmp.ne.s32.totalorder %s88, %s90
    %p94 = scmp.eq.s32.totalorder %s12, 0
    %p95 = por %p93, %p94
    %p96 = scmp.ne.s32.totalorder %s88, %s90
    %p97 = scmp.eq.s32.totalorder %s17, 1
    %p98 = por %p96, %p97
    %p99 = scmp.ne.s32.totalorder %s90, %s91
    %p100 = scmp.eq.s32.totalorder %s17, 0
    %p101 = por %p99, %p100
    %p102 = scmp.ne.s32.totalorder %s90, %s91
    %p103 = scmp.eq.s32.totalorder %s18, 1
    %p104 = por %p102, %p103
    %p106 = scmp.ne.s32.totalorder %s91, %s105
    %p107 = scmp.eq.s32.totalorder %s18, 0
    %p108 = por %p106, %p107
    %s110 = sadd.s32 %s109, 1
    %p113 = scmp.eq.s32.totalorder %s12, 1
    %p114 = scmp.ne.s32.totalorder %s109, %s111
    %p115 = scmp.eq.s32.totalorder %s12, 0
    %p116 = por %p114, %p115
    %p117 = scmp.ne.s32.totalorder %s109, %s111
    %p118 = scmp.eq.s32.totalorder %s17, 1
    %p119 = por %p117, %p118
    %p120 = scmp.ne.s32.totalorder %s111, %s112
    %p121 = scmp.eq.s32.totalorder %s17, 0
    %p122 = por %p120, %p121
    %p123 = scmp.ne.s32.totalorder %s111, %s112
    %p124 = scmp.eq.s32.totalorder %s18, 1
    %p125 = por %p123, %p124
    %p127 = scmp.ne.s32.totalorder %s112, %s126
    %p128 = scmp.eq.s32.totalorder %s18, 0
    %p129 = por %p127, %p128
    %s131 = sadd.s32 %s130, 1
    %p134 = scmp.eq.s32.totalorder %s12, 1
    %p135 = scmp.ne.s32.totalorder %s130, %s132
    %p136 = scmp.eq.s32.totalorder %s12, 0
    %p137 = por %p135, %p136
    %p138 = scmp.ne.s32.totalorder %s130, %s132
    %p139 = scmp.eq.s32.totalorder %s17, 1
    %p140 = por %p138, %p139
    %p141 = scmp.ne.s32.totalorder %s132, %s133
    %p142 = scmp.eq.s32.totalorder %s17, 0
    %p143 = por %p141, %p142
    %p144 = scmp.ne.s32.totalorder %s132, %s133
    %p145 = scmp.eq.s32.totalorder %s18, 1
    %p146 = por %p144, %p145
    %p148 = scmp.ne.s32.totalorder %s133, %s147
    %p149 = scmp.eq.s32.totalorder %s18, 0
    %p150 = por %p148, %p149
    %s151 = ssub.s32 %s12, %s19
    %p152 = scmp.eq.s32.totalorder %s151, 0
    %s154 = sadd.s32 %s153, 1
    %s155 = scalar_select %p152, %s153, %s154
    %p158 = pneg %p152
    %p159 = scmp.eq.s32.totalorder %s12, 1
    %p160 = por %p158, %p159
    %p161 = scmp.ne.s32.totalorder %s153, %s156
    %p162 = scmp.eq.s32.totalorder %s12, 0
    %p163 = por %p161, %p162
    %p164 = scmp.ne.s32.totalorder %s153, %s156
    %p165 = scmp.eq.s32.totalorder %s17, 1
    %p166 = por %p164, %p165
    %p167 = scmp.ne.s32.totalorder %s156, %s157
    %p168 = scmp.eq.s32.totalorder %s17, 0
    %p169 = por %p167, %p168
    %p170 = scmp.ne.s32.totalorder %s156, %s157
    %p171 = scmp.eq.s32.totalorder %s18, 1
    %p172 = por %p170, %p171
    %p174 = scmp.ne.s32.totalorder %s157, %s173
    %p175 = scmp.eq.s32.totalorder %s18, 0
    %p176 = por %p174, %p175
    %p177 = scmp.le.s32.totalorder 1, %s12
    %p178 = scmp.lt.s32.totalorder %s12, 3
    %p179 = pnand %p177, %p178
    %p180 = pneg %p179
    // Predicated region
    $region9: #{trans_spatial_residual_block.1} parent=5 // pred_check
      _
    $region10: #{trans_spatial_residual_block.1} parent=5 // pred_check_branch
      %182 = sbr.rel (%p179) target = $region12
    $region11: #{trans_spatial_residual_block.1} parent=5 // pred_region
      %s183 = ssub.s32 %s12, 1
      // Predicated region
      $region13: #{trans_spatial_residual_block.1} parent=11 // pred_check
        %p184 = pneg %p59
      $region14: #{trans_spatial_residual_block.1} parent=11 // pred_check_branch
        %186 = sbr.rel (%p184) target = $region16
      $region15: #{trans_spatial_residual_block.1} parent=11 // pred_region
        _
      $region16: #{trans_spatial_residual_block.1} parent=11 // pred_fallthru
        _
      // Predicated region
      $region17: #{trans_spatial_residual_block.1} parent=11 // pred_check
        %p187 = pneg %p80
      $region18: #{trans_spatial_residual_block.1} parent=11 // pred_check_branch
        %189 = sbr.rel (%p187) target = $region20
      $region19: #{trans_spatial_residual_block.1} parent=11 // pred_region
        _
      $region20: #{trans_spatial_residual_block.1} parent=11 // pred_fallthru
        _
      // Predicated region
      $region21: #{trans_spatial_residual_block.1} parent=11 // pred_check
        %p190 = pneg %p101
      $region22: #{trans_spatial_residual_block.1} parent=11 // pred_check_branch
        %192 = sbr.rel (%p190) target = $region24
      $region23: #{trans_spatial_residual_block.1} parent=11 // pred_region
        _
      $region24: #{trans_spatial_residual_block.1} parent=11 // pred_fallthru
        _
      // Predicated region
      $region25: #{trans_spatial_residual_block.1} parent=11 // pred_check
        %p193 = pneg %p122
      $region26: #{trans_spatial_residual_block.1} parent=11 // pred_check_branch
        %195 = sbr.rel (%p193) target = $region28
      $region27: #{trans_spatial_residual_block.1} parent=11 // pred_region
        _
      $region28: #{trans_spatial_residual_block.1} parent=11 // pred_fallthru
        _
      // Predicated region
      $region29: #{trans_spatial_residual_block.1} parent=11 // pred_check
        %p196 = pneg %p143
      $region30: #{trans_spatial_residual_block.1} parent=11 // pred_check_branch
        %198 = sbr.rel (%p196) target = $region32
      $region31: #{trans_spatial_residual_block.1} parent=11 // pred_region
        _
      $region32: #{trans_spatial_residual_block.1} parent=11 // pred_fallthru
        _
    $region12: #{trans_spatial_residual_block.1} parent=5 // pred_fallthru
      _
    %p199 = scmp.lt.s32.totalorder %s12, 2
    // Predicated region
    $region33: #{trans_spatial_residual_block.1} parent=5 // pred_check
      %p200 = pneg %p199
    $region34: #{trans_spatial_residual_block.1} parent=5 // pred_check_branch
      %202 = sbr.rel (%p200) target = $region36
    $region35: #{trans_spatial_residual_block.1} parent=5 // pred_region
      // Predicated region
      $region37: #{trans_spatial_residual_block.1} parent=35 // pred_check
        %p203 = pneg %p32
      $region38: #{trans_spatial_residual_block.1} parent=35 // pred_check_branch
        %205 = sbr.rel (%p203) target = $region40
      $region39: #{trans_spatial_residual_block.1} parent=35 // pred_region
        %p206 = scmp.lt.s32.totalorder %s12, 1
        %s207 = scalar_select %p206, %s12, 1
        %s208 = smul.addr %s207, 4
        %s209 = smul.addr %s208, 4
        %s210 = scalar_lea.vmem %s0, %s209
      $region40: #{trans_spatial_residual_block.1} parent=35 // pred_fallthru
        _
    $region36: #{trans_spatial_residual_block.1} parent=5 // pred_fallthru
      _
    %p211 = scmp.le.s32.totalorder 1, %s12
    %p212 = scmp.lt.s32.totalorder %s12, 3
    %p213 = pnand %p211, %p212
    %p214 = pneg %p213
    // Predicated region
    $region41: #{trans_spatial_residual_block.1} parent=5 // pred_check
      _
    $region42: #{trans_spatial_residual_block.1} parent=5 // pred_check_branch
      %216 = sbr.rel (%p213) target = $region44
    $region43: #{trans_spatial_residual_block.1} parent=5 // pred_region
      %s217 = ssub.s32 %s12, 1
      %p218 = scmp.lt.s32.totalorder %s17, 1
      %s219 = scalar_select %p218, %s17, 1
      %s220 = smul.addr %s219, 4
      %s221 = smul.addr %s220, 4
      %s222 = scalar_lea.vmem %s0, %s221
      %p223 = pneg %p38
      %p224 = pneg %p35
      %p225 = pneg %p59
      %p226 = pneg %p56
      %p227 = pneg %p80
      %p228 = pneg %p77
      %p229 = pneg %p101
      %p230 = pneg %p98
      %p231 = pneg %p122
      %p232 = pneg %p119
      %p233 = pneg %p143
      %p234 = pneg %p140
      %p235 = pneg %p169
      %p236 = pneg %p166
      %p237 = scmp.lt.s32.totalorder %s17, 1
      %s238 = scalar_select %p237, %s17, 1
      %s239 = smul.addr %s238, 3
      %s240 = smul.addr %s239, 4
      %s241 = scalar_lea.vmem %s6, %s240
      %p242 = scmp.lt.s32.totalorder %s17, 1
      %s243 = scalar_select %p242, %s17, 1
      %s244 = smul.addr %s243, 4
      %s245 = smul.addr %s244, 4
      %s246 = scalar_lea.vmem %s0, %s245
      %p247 = scmp.lt.s32.totalorder %s17, 1
      %s248 = scalar_select %p247, %s17, 1
      %s249 = smul.addr %s248, 3
      %s250 = smul.addr %s249, 4
      %s251 = scalar_lea.vmem %s6, %s250
      %vm252 = vcmask 142336
      %253 = vst.msk [vmem:[#allocation2] sm:$0xf] %vm252, 0.0
      %vm254 = vcmask 1043600
      %255 = vst.msk [vmem:[#allocation2 + $0xc] sm:$0xf] %vm254, 0.0
      %v256 = vld [vmem:[%s5] sm:$0x7]
      %v257 = vld [vmem:[%s246] sm:$0xff]
      %v258 = vld [vmem:[%s246 + $0x8] sm:$0xff]
      %v261 = vcombine.high %v257, %v257
      %v262 = vcombine.high %v258, %v258
      %263 = vrot.lane.b32.xlu0 %v257, 110
      %v264 = vpop.permute.xlu0 %263
      %265 = vrot.lane.b32.xlu0 %v261, 110
      %v266 = vpop.permute.xlu0 %265
      %267 = vrot.lane.b32.xlu0 %v258, 110
      %v268 = vpop.permute.xlu0 %267
      %269 = vrot.lane.b32.xlu0 %v262, 110
      %v270 = vpop.permute.xlu0 %269
      %vm271 = vcmask 900096
      %v272 = vsel %vm271, %v264, %v266
      %v273 = vsel %vm271, %v266, %v268
      %v274 = vsel %vm271, %v268, %v270
      %278 = vst [vmem:[#allocation3] sm:$0xf] %v272
      %279 = vst [vmem:[#allocation3 + $0x8] sm:$0xf] %v273
      %280 = vst [vmem:[#allocation3 + $0x10] sm:$0xf] %v274
      %v281 = vcombine.low %v257, %v257
      %v282 = vcombine.low %v258, %v258
      %283 = vrot.lane.b32.xlu0 %v281, 109
      %v284 = vpop.permute.xlu0 %283
      %285 = vrot.lane.b32.xlu0 %v257, 109
      %v286 = vpop.permute.xlu0 %285
      %287 = vrot.lane.b32.xlu0 %v282, 109
      %v288 = vpop.permute.xlu0 %287
      %289 = vrot.lane.b32.xlu0 %v258, 109
      %v290 = vpop.permute.xlu0 %289
      %vm291 = vcmask 891904
      %v292 = vsel %vm291, %v284, %v286
      %v293 = vsel %vm291, %v286, %v288
      %v294 = vsel %vm291, %v288, %v290
      %298 = vst [vmem:[#allocation3] sm:$0xf0] %v292
      %299 = vst [vmem:[#allocation3 + $0x8] sm:$0xf0] %v293
      %300 = vst [vmem:[#allocation3 + $0x10] sm:$0xf0] %v294
      %301 = vrot.lane.b32.xlu0 %v257, 108
      %v302 = vpop.permute.xlu0 %301
      %303 = vrot.lane.b32.xlu0 %v261, 108
      %v304 = vpop.permute.xlu0 %303
      %305 = vrot.lane.b32.xlu0 %v258, 108
      %v306 = vpop.permute.xlu0 %305
      %307 = vrot.lane.b32.xlu0 %v262, 108
      %v308 = vpop.permute.xlu0 %307
      %vm309 = vcmask 883712
      %v310 = vsel %vm309, %v302, %v304
      %v311 = vsel %vm309, %v304, %v306
      %v312 = vsel %vm309, %v306, %v308
      %316 = vst [vmem:[#allocation3 + $0x18] sm:$0xf] %v310
      %317 = vst [vmem:[#allocation3 + $0x20] sm:$0xf] %v311
      %318 = vst [vmem:[#allocation3 + $0x28] sm:$0xf] %v312
      %319 = vrot.lane.b32.xlu0 %v281, 92
      %v320 = vpop.permute.xlu0 %319
      %321 = vrot.lane.b32.xlu0 %v257, 92
      %v322 = vpop.permute.xlu0 %321
      %323 = vrot.lane.b32.xlu0 %v282, 92
      %v324 = vpop.permute.xlu0 %323
      %325 = vrot.lane.b32.xlu0 %v258, 92
      %v326 = vpop.permute.xlu0 %325
      %vm327 = vcmask 752640
      %v328 = vsel %vm327, %v320, %v322
      %v329 = vsel %vm327, %v322, %v324
      %v330 = vsel %vm327, %v324, %v326
      %334 = vst [vmem:[#allocation3 + $0x18] sm:$0xf0] %v328
      %335 = vst [vmem:[#allocation3 + $0x20] sm:$0xf0] %v329
      %336 = vst [vmem:[#allocation3 + $0x28] sm:$0xf0] %v330
      %337 = vrot.lane.b32.xlu0 %v257, 91
      %v338 = vpop.permute.xlu0 %337
      %339 = vrot.lane.b32.xlu0 %v261, 91
      %v340 = vpop.permute.xlu0 %339
      %341 = vrot.lane.b32.xlu0 %v258, 91
      %v342 = vpop.permute.xlu0 %341
      %343 = vrot.lane.b32.xlu0 %v262, 91
      %v344 = vpop.permute.xlu0 %343
      %vm345 = vcmask 744448
      %v346 = vsel %vm345, %v338, %v340
      %v347 = vsel %vm345, %v340, %v342
      %v348 = vsel %vm345, %v342, %v344
      %352 = vst [vmem:[#allocation3 + $0x30] sm:$0xf] %v346
      %353 = vst [vmem:[#allocation3 + $0x38] sm:$0xf] %v347
      %354 = vst [vmem:[#allocation3 + $0x40] sm:$0xf] %v348
      %355 = vrot.lane.b32.xlu0 %v281, 90
      %v356 = vpop.permute.xlu0 %355
      %357 = vrot.lane.b32.xlu0 %v257, 90
      %v358 = vpop.permute.xlu0 %357
      %359 = vrot.lane.b32.xlu0 %v282, 90
      %v360 = vpop.permute.xlu0 %359
      %361 = vrot.lane.b32.xlu0 %v258, 90
      %v362 = vpop.permute.xlu0 %361
      %vm363 = vcmask 736256
      %v364 = vsel %vm363, %v356, %v358
      %v365 = vsel %vm363, %v358, %v360
      %v366 = vsel %vm363, %v360, %v362
      %370 = vst [vmem:[#allocation3 + $0x30] sm:$0xf0] %v364
      %371 = vst [vmem:[#allocation3 + $0x38] sm:$0xf0] %v365
      %372 = vst [vmem:[#allocation3 + $0x40] sm:$0xf0] %v366
      %373 = vrot.lane.b32.xlu0 %v257, 74
      %v374 = vpop.permute.xlu0 %373
      %375 = vrot.lane.b32.xlu0 %v261, 74
      %v376 = vpop.permute.xlu0 %375
      %377 = vrot.lane.b32.xlu0 %v258, 74
      %v378 = vpop.permute.xlu0 %377
      %379 = vrot.lane.b32.xlu0 %v262, 74
      %v380 = vpop.permute.xlu0 %379
      %vm381 = vcmask 605184
      %v382 = vsel %vm381, %v374, %v376
      %v383 = vsel %vm381, %v376, %v378
      %v384 = vsel %vm381, %v378, %v380
      %388 = vst [vmem:[#allocation3 + $0x48] sm:$0xf] %v382
      %389 = vst [vmem:[#allocation3 + $0x50] sm:$0xf] %v383
      %390 = vst [vmem:[#allocation3 + $0x58] sm:$0xf] %v384
      %391 = vrot.lane.b32.xlu0 %v281, 73
      %v392 = vpop.permute.xlu0 %391
      %393 = vrot.lane.b32.xlu0 %v257, 73
      %v394 = vpop.permute.xlu0 %393
      %395 = vrot.lane.b32.xlu0 %v282, 73
      %v396 = vpop.permute.xlu0 %395
      %397 = vrot.lane.b32.xlu0 %v258, 73
      %v398 = vpop.permute.xlu0 %397
      %vm399 = vcmask 596992
      %v400 = vsel %vm399, %v392, %v394
      %v401 = vsel %vm399, %v394, %v396
      %v402 = vsel %vm399, %v396, %v398
      %406 = vst [vmem:[#allocation3 + $0x48] sm:$0xf0] %v400
      %407 = vst [vmem:[#allocation3 + $0x50] sm:$0xf0] %v401
      %408 = vst [vmem:[#allocation3 + $0x58] sm:$0xf0] %v402
      %409 = vrot.lane.b32.xlu0 %v257, 72
      %v410 = vpop.permute.xlu0 %409
      %411 = vrot.lane.b32.xlu0 %v261, 72
      %v412 = vpop.permute.xlu0 %411
      %413 = vrot.lane.b32.xlu0 %v258, 72
      %v414 = vpop.permute.xlu0 %413
      %415 = vrot.lane.b32.xlu0 %v262, 72
      %v416 = vpop.permute.xlu0 %415
      %vm417 = vcmask 588800
      %v418 = vsel %vm417, %v410, %v412
      %v419 = vsel %vm417, %v412, %v414
      %v420 = vsel %vm417, %v414, %v416
      %424 = vst [vmem:[#allocation3 + $0x60] sm:$0xf] %v418
      %425 = vst [vmem:[#allocation3 + $0x68] sm:$0xf] %v419
      %426 = vst [vmem:[#allocation3 + $0x70] sm:$0xf] %v420
      %v427 = vld [vmem:[%s1] sm:$0xf]
      %v428 = vld [vmem:[#allocation3] sm:$0xff]
      %v429 = vld [vmem:[#allocation3 + $0x8] sm:$0xff]
      %v430 = vld [vmem:[#allocation3 + $0x10] sm:$0xff]
      %v431 = vld [vmem:[#allocation3 + $0x18] sm:$0xff]
      %v432 = vld [vmem:[#allocation3 + $0x20] sm:$0xff]
      %v433 = vld [vmem:[#allocation3 + $0x28] sm:$0xff]
      %v434 = vld [vmem:[#allocation3 + $0x30] sm:$0xff]
      %v435 = vld [vmem:[#allocation3 + $0x38] sm:$0xff]
      %v436 = vld [vmem:[#allocation3 + $0x40] sm:$0xff]
      %v437 = vld [vmem:[#allocation3 + $0x48] sm:$0xff]
      %v438 = vld [vmem:[#allocation3 + $0x50] sm:$0xff]
      %v439 = vld [vmem:[#allocation3 + $0x58] sm:$0xff]
      %v440 = vld [vmem:[#allocation3 + $0x60] sm:$0xf]
      %v441 = vld [vmem:[#allocation3 + $0x68] sm:$0xf]
      %v442 = vld [vmem:[#allocation3 + $0x70] sm:$0xf]
      %v443 = vld [vmem:[%s2] sm:$0xf]
      %445 = vset.pattern.permute.xlu0 0
      %446 = vperm.xlu0 %445, %v443
      %v447 = vpop.permute.xlu0 %446
      %vm449 = vcmask 293888
      %v451 = vsel %vm449, %v427, 0
      %vm453 = vcmask 1043456
      %v455 = vsel %vm453, %v440, 0
      %v458 = vsel %vm453, %v441, 0
      %v461 = vsel %vm453, %v442, 0
      %463 = vmatprep.subr.mxu0 %v429
      %464 = vmatpush1.msra.mxu0 %v428
      %465 = vmatprep.subr.mxu0 %v432
      %466 = vmatpush1.msra.mxu0 %v431
      %467 = vmatprep.subr.mxu0 %v435
      %468 = vmatpush1.msra.mxu0 %v434
      %469 = vmatprep.subr.mxu0 %v438
      %470 = vmatpush1.msra.mxu0 %v437
      %471 = vmatprep.subr.mxu0 %v458
      %472 = vmatpush1.msra.mxu0 %v455
      %473 = vmatprep.subr.mxu0 0.0
      %474 = vmatpush1.msra.mxu0 0.0
      %475 = vmatprep.subr.mxu0 0.0
      %476 = vmatpush1.msra.mxu0 0.0
      %477 = vmatprep.subr.mxu0 0.0
      %478 = vmatpush1.msra.mxu0 0.0
      %479 = vmatprep.subr.mxu0 0.0
      %480 = vmatpush1.msra.mxu0 0.0
      %481 = vmatprep.subr.mxu0 0.0
      %482 = vmatpush1.msra.mxu0 0.0
      %483 = vmatprep.subr.mxu0 0.0
      %484 = vmatpush1.msra.mxu0 0.0
      %485 = vmatprep.subr.mxu0 0.0
      %486 = vmatpush1.msra.mxu0 0.0
      %487 = vmatprep.subr.mxu0 0.0
      %488 = vmatpush1.msra.mxu0 0.0
      %489 = vmatprep.subr.mxu0 0.0
      %490 = vmatpush1.msra.mxu0 0.0
      %491 = vmatprep.subr.mxu0 0.0
      %492 = vmatpush1.msra.mxu0 0.0
      %493 = vmatprep.subr.mxu0 0.0
      %494 = vmatpush1.msra.mxu0 0.0
      %495 = vmatprep.subr.mxu0 0.0
      %496 = vmatpush1.msra.mxu0 0.0
      %497 = vmatprep.subr.mxu0 0.0
      %498 = vmatpush1.msra.mxu0 0.0
      %499 = vmatprep.subr.mxu0 0.0
      %500 = vmatpush1.msra.mxu0 0.0
      %501 = vmatprep.subr.mxu0 0.0
      %502 = vmatpush1.msra.mxu0 0.0
      %503 = vmatprep.subr.mxu0 0.0
      %504 = vmatpush1.msra.mxu0 0.0
      %505 = vmatprep.subr.mxu0 0.0
      %506 = vmatpush1.msra.mxu0 0.0
      %507 = vmatprep.subr.mxu0 0.0
      %508 = vmatpush1.msra.mxu0 0.0
      %509 = vmatprep.subr.mxu0 0.0
      %510 = vmatpush1.msra.mxu0 0.0
      %511 = vmatprep.subr.mxu0 0.0
      %512 = vmatpush1.msra.mxu0 0.0
      %513 = vmatprep.subr.mxu0 0.0
      %514 = vmatpush1.msra.mxu0 0.0
      %515 = vmatprep.subr.mxu0 0.0
      %516 = vmatpush1.msra.mxu0 0.0
      %517 = vmatprep.subr.mxu0 0.0
      %518 = vmatpush1.msra.mxu0 0.0
      %519 = vmatprep.subr.mxu0 0.0
      %520 = vmatpush1.msra.mxu0 0.0
      %521 = vmatprep.subr.mxu0 0.0
      %522 = vmatpush1.msra.mxu0 0.0
      %523 = vmatprep.subr.mxu0 0.0
      %524 = vmatpush1.msra.mxu0 0.0
      %525 = vmatprep.subr.mxu0 0.0
      %526 = vmatpush1.msra.mxu0 0.0
      %527 = vmatprep.mubr.f32.mxu0 0.0
      %528 = vmatmul.mubr.f32.gmra.mrb[0].mxu0 %v451
      %v529 = vpop.f32.mrb[0].mxu0
      %v530 = vadd.f32 %v447, %v529
      %v531 = vpop.f32.mrb[0].mxu0
      %v532 = vadd.f32 %v447, %v531
      %533 = vdwg.mxu0
      %534 = vmatprep.subr.mxu0 0.0
      %535 = vmatpush1.msra.mxu0 %v430
      %536 = vmatprep.subr.mxu0 0.0
      %537 = vmatpush1.msra.mxu0 %v433
      %538 = vmatprep.subr.mxu0 0.0
      %539 = vmatpush1.msra.mxu0 %v436
      %540 = vmatprep.subr.mxu0 0.0
      %541 = vmatpush1.msra.mxu0 %v439
      %542 = vmatprep.subr.mxu0 0.0
      %543 = vmatpush1.msra.mxu0 %v461
      %544 = vmatprep.subr.mxu0 0.0
      %545 = vmatpush1.msra.mxu0 0.0
      %546 = vmatprep.subr.mxu0 0.0
      %547 = vmatpush1.msra.mxu0 0.0
      %548 = vmatprep.subr.mxu0 0.0
      %549 = vmatpush1.msra.mxu0 0.0
      %550 = vmatprep.subr.mxu0 0.0
      %551 = vmatpush1.msra.mxu0 0.0
      %552 = vmatprep.subr.mxu0 0.0
      %553 = vmatpush1.msra.mxu0 0.0
      %554 = vmatprep.subr.mxu0 0.0
      %555 = vmatpush1.msra.mxu0 0.0
      %556 = vmatprep.subr.mxu0 0.0
      %557 = vmatpush1.msra.mxu0 0.0
      %558 = vmatprep.subr.mxu0 0.0
      %559 = vmatpush1.msra.mxu0 0.0
      %560 = vmatprep.subr.mxu0 0.0
      %561 = vmatpush1.msra.mxu0 0.0
      %562 = vmatprep.subr.mxu0 0.0
      %563 = vmatpush1.msra.mxu0 0.0
      %564 = vmatprep.subr.mxu0 0.0
      %565 = vmatpush1.msra.mxu0 0.0
      %566 = vmatprep.subr.mxu0 0.0
      %567 = vmatpush1.msra.mxu0 0.0
      %568 = vmatprep.subr.mxu0 0.0
      %569 = vmatpush1.msra.mxu0 0.0
      %570 = vmatprep.subr.mxu0 0.0
      %571 = vmatpush1.msra.mxu0 0.0
      %572 = vmatprep.subr.mxu0 0.0
      %573 = vmatpush1.msra.mxu0 0.0
      %574 = vmatprep.subr.mxu0 0.0
      %575 = vmatpush1.msra.mxu0 0.0
      %576 = vmatprep.subr.mxu0 0.0
      %577 = vmatpush1.msra.mxu0 0.0
      %578 = vmatprep.subr.mxu0 0.0
      %579 = vmatpush1.msra.mxu0 0.0
      %580 = vmatprep.subr.mxu0 0.0
      %581 = vmatpush1.msra.mxu0 0.0
      %582 = vmatprep.subr.mxu0 0.0
      %583 = vmatpush1.msra.mxu0 0.0
      %584 = vmatprep.subr.mxu0 0.0
      %585 = vmatpush1.msra.mxu0 0.0
      %586 = vmatprep.subr.mxu0 0.0
      %587 = vmatpush1.msra.mxu0 0.0
      %588 = vmatprep.subr.mxu0 0.0
      %589 = vmatpush1.msra.mxu0 0.0
      %590 = vmatprep.subr.mxu0 0.0
      %591 = vmatpush1.msra.mxu0 0.0
      %592 = vmatprep.subr.mxu0 0.0
      %593 = vmatpush1.msra.mxu0 0.0
      %594 = vmatprep.subr.mxu0 0.0
      %595 = vmatpush1.msra.mxu0 0.0
      %596 = vmatprep.subr.mxu0 0.0
      %597 = vmatpush1.msra.mxu0 0.0
      %598 = vmatprep.mubr.f32.mxu0 0.0
      %599 = vmatmul.mubr.f32.gmra.mrb[0].mxu0 %v451
      %v600 = vpop.f32.mrb[0].mxu0
      %v601 = vadd.f32 %v447, %v600
      %v602 = vpop.f32.mrb[0].mxu0
      %603 = vdwg.mxu0
      %v604 = vmax.f32 %v530, 0.0
      %v605 = vmax.f32 %v532, 0.0
      %v606 = vmax.f32 %v601, 0.0
      %v608 = vlaneseq
      %v609 = vshrl.u32 %v608, 7
      %v610 = vsub.s32 0, %v609
      %v611 = vrot.slane %v256, %v610
      %v612 = vlaneseq
      %v613 = vshrl.u32 %v612, 7
      %v614 = vsub.s32 1, %v613
      %v615 = vrot.slane %v256, %v614
      %v616 = vlaneseq
      %v617 = vshrl.u32 %v616, 7
      %v618 = vsub.s32 2, %v617
      %v619 = vrot.slane %v256, %v618
      %v623 = vmul.f32 %v604, %v611
      %v624 = vmul.f32 %v605, %v615
      %v625 = vmul.f32 %v606, %v619
      %v629 = vcombine.low %v623, %v624
      %630 = vrot.lane.b32.xlu0 %v629, 18
      %v631 = vpop.permute.xlu0 %630
      %632 = vrot.lane.b32.xlu0 %v625, 18
      %v633 = vpop.permute.xlu0 %632
      %v634 = vrot.slane %v631, 4
      %v635 = vrot.slane %v633, 4
      %vm636 = vcmask 146432
      %v637 = vsel %vm636, %v634, %v631
      %v638 = vsel %vm453, %v634, %v635
      %v639 = vsel %vm636, %v638, %v633
      %vm642 = vcmask 1047556
      %vm643 = vmor %vm642, %vm254
      %644 = vst.msk [vmem:[#allocation2] sm:$0xff] %vm643, %v637
      %vm645 = vcmask 146436
      %vm646 = vmor %vm645, %vm453
      %647 = vst.msk [vmem:[#allocation2 + $0x8] sm:$0xff] %vm646, %v639
      %v648 = vld [vmem:[#allocation2] sm:$0xff]
      %v649 = vld [vmem:[#allocation2 + $0x8] sm:$0xff]
      %v652 = vcombine.high %v648, %v648
      %654 = vst [vmem:[#allocation3] sm:$0xf] %v648
      %655 = vst [vmem:[#allocation3 + $0x8] sm:$0xf] %v652
      %656 = vst [vmem:[#allocation3 + $0x10] sm:$0xf] %v649
      %v657 = vcombine.low %v648, %v648
      %v658 = vcombine.low %v649, %v649
      %659 = vrot.lane.b32.xlu0 %v657, 127
      %v660 = vpop.permute.xlu0 %659
      %661 = vrot.lane.b32.xlu0 %v648, 127
      %v662 = vpop.permute.xlu0 %661
      %663 = vrot.lane.b32.xlu0 %v658, 127
      %v664 = vpop.permute.xlu0 %663
      %665 = vrot.lane.b32.xlu0 %v649, 127
      %v666 = vpop.permute.xlu0 %665
      %vm667 = vcmask 1039360
      %v668 = vsel %vm667, %v660, %v662
      %v669 = vsel %vm667, %v662, %v664
      %v670 = vsel %vm667, %v664, %v666
      %674 = vst [vmem:[#allocation3] sm:$0xf0] %v668
      %675 = vst [vmem:[#allocation3 + $0x8] sm:$0xf0] %v669
      %676 = vst [vmem:[#allocation3 + $0x10] sm:$0xf0] %v670
      %v677 = vcombine.high %v649, %v649
      %678 = vrot.lane.b32.xlu0 %v648, 126
      %v679 = vpop.permute.xlu0 %678
      %680 = vrot.lane.b32.xlu0 %v652, 126
      %v681 = vpop.permute.xlu0 %680
      %682 = vrot.lane.b32.xlu0 %v649, 126
      %v683 = vpop.permute.xlu0 %682
      %684 = vrot.lane.b32.xlu0 %v677, 126
      %v685 = vpop.permute.xlu0 %684
      %vm686 = vcmask 1031168
      %v687 = vsel %vm686, %v679, %v681
      %v688 = vsel %vm686, %v681, %v683
      %v689 = vsel %vm686, %v683, %v685
      %693 = vst [vmem:[#allocation3 + $0x18] sm:$0xf] %v687
      %694 = vst [vmem:[#allocation3 + $0x20] sm:$0xf] %v688
      %695 = vst [vmem:[#allocation3 + $0x28] sm:$0xf] %v689
      %696 = vrot.lane.b32.xlu0 %v657, 110
      %v697 = vpop.permute.xlu0 %696
      %698 = vrot.lane.b32.xlu0 %v648, 110
      %v699 = vpop.permute.xlu0 %698
      %700 = vrot.lane.b32.xlu0 %v658, 110
      %v701 = vpop.permute.xlu0 %700
      %702 = vrot.lane.b32.xlu0 %v649, 110
      %v703 = vpop.permute.xlu0 %702
      %v704 = vsel %vm271, %v697, %v699
      %v705 = vsel %vm271, %v699, %v701
      %v706 = vsel %vm271, %v701, %v703
      %710 = vst [vmem:[#allocation3 + $0x18] sm:$0xf0] %v704
      %711 = vst [vmem:[#allocation3 + $0x20] sm:$0xf0] %v705
      %712 = vst [vmem:[#allocation3 + $0x28] sm:$0xf0] %v706
      %713 = vrot.lane.b32.xlu0 %v648, 109
      %v714 = vpop.permute.xlu0 %713
      %715 = vrot.lane.b32.xlu0 %v652, 109
      %v716 = vpop.permute.xlu0 %715
      %717 = vrot.lane.b32.xlu0 %v649, 109
      %v718 = vpop.permute.xlu0 %717
      %719 = vrot.lane.b32.xlu0 %v677, 109
      %v720 = vpop.permute.xlu0 %719
      %v721 = vsel %vm291, %v714, %v716
      %v722 = vsel %vm291, %v716, %v718
      %v723 = vsel %vm291, %v718, %v720
      %727 = vst [vmem:[#allocation3 + $0x30] sm:$0xf] %v721
      %728 = vst [vmem:[#allocation3 + $0x38] sm:$0xf] %v722
      %729 = vst [vmem:[#allocation3 + $0x40] sm:$0xf] %v723
      %730 = vrot.lane.b32.xlu0 %v657, 108
      %v731 = vpop.permute.xlu0 %730
      %732 = vrot.lane.b32.xlu0 %v648, 108
      %v733 = vpop.permute.xlu0 %732
      %734 = vrot.lane.b32.xlu0 %v658, 108
      %v735 = vpop.permute.xlu0 %734
      %736 = vrot.lane.b32.xlu0 %v649, 108
      %v737 = vpop.permute.xlu0 %736
      %v738 = vsel %vm309, %v731, %v733
      %v739 = vsel %vm309, %v733, %v735
      %v740 = vsel %vm309, %v735, %v737
      %744 = vst [vmem:[#allocation3 + $0x30] sm:$0xf0] %v738
      %745 = vst [vmem:[#allocation3 + $0x38] sm:$0xf0] %v739
      %746 = vst [vmem:[#allocation3 + $0x40] sm:$0xf0] %v740
      %747 = vrot.lane.b32.xlu0 %v648, 92
      %v748 = vpop.permute.xlu0 %747
      %749 = vrot.lane.b32.xlu0 %v652, 92
      %v750 = vpop.permute.xlu0 %749
      %751 = vrot.lane.b32.xlu0 %v649, 92
      %v752 = vpop.permute.xlu0 %751
      %753 = vrot.lane.b32.xlu0 %v677, 92
      %v754 = vpop.permute.xlu0 %753
      %v755 = vsel %vm327, %v748, %v750
      %v756 = vsel %vm327, %v750, %v752
      %v757 = vsel %vm327, %v752, %v754
      %761 = vst [vmem:[#allocation3 + $0x48] sm:$0xf] %v755
      %762 = vst [vmem:[#allocation3 + $0x50] sm:$0xf] %v756
      %763 = vst [vmem:[#allocation3 + $0x58] sm:$0xf] %v757
      %764 = vrot.lane.b32.xlu0 %v657, 91
      %v765 = vpop.permute.xlu0 %764
      %766 = vrot.lane.b32.xlu0 %v648, 91
      %v767 = vpop.permute.xlu0 %766
      %768 = vrot.lane.b32.xlu0 %v658, 91
      %v769 = vpop.permute.xlu0 %768
      %770 = vrot.lane.b32.xlu0 %v649, 91
      %v771 = vpop.permute.xlu0 %770
      %v772 = vsel %vm345, %v765, %v767
      %v773 = vsel %vm345, %v767, %v769
      %v774 = vsel %vm345, %v769, %v771
      %778 = vst [vmem:[#allocation3 + $0x48] sm:$0xf0] %v772
      %779 = vst [vmem:[#allocation3 + $0x50] sm:$0xf0] %v773
      %780 = vst [vmem:[#allocation3 + $0x58] sm:$0xf0] %v774
      %781 = vrot.lane.b32.xlu0 %v648, 90
      %v782 = vpop.permute.xlu0 %781
      %783 = vrot.lane.b32.xlu0 %v652, 90
      %v784 = vpop.permute.xlu0 %783
      %785 = vrot.lane.b32.xlu0 %v649, 90
      %v786 = vpop.permute.xlu0 %785
      %787 = vrot.lane.b32.xlu0 %v677, 90
      %v788 = vpop.permute.xlu0 %787
      %v789 = vsel %vm363, %v782, %v784
      %v790 = vsel %vm363, %v784, %v786
      %v791 = vsel %vm363, %v786, %v788
      %795 = vst [vmem:[#allocation3 + $0x60] sm:$0xf] %v789
      %796 = vst [vmem:[#allocation3 + $0x68] sm:$0xf] %v790
      %797 = vst [vmem:[#allocation3 + $0x70] sm:$0xf] %v791
      %v798 = vld [vmem:[%s3] sm:$0xf]
      %v799 = vld [vmem:[#allocation3] sm:$0xff]
      %v800 = vld [vmem:[#allocation3 + $0x8] sm:$0xff]
      %v801 = vld [vmem:[#allocation3 + $0x10] sm:$0xff]
      %v802 = vld [vmem:[#allocation3 + $0x18] sm:$0xff]
      %v803 = vld [vmem:[#allocation3 + $0x20] sm:$0xff]
      %v804 = vld [vmem:[#allocation3 + $0x28] sm:$0xff]
      %v805 = vld [vmem:[#allocation3 + $0x30] sm:$0xff]
      %v806 = vld [vmem:[#allocation3 + $0x38] sm:$0xff]
      %v807 = vld [vmem:[#allocation3 + $0x40] sm:$0xff]
      %v808 = vld [vmem:[#allocation3 + $0x48] sm:$0xff]
      %v809 = vld [vmem:[#allocation3 + $0x50] sm:$0xff]
      %v810 = vld [vmem:[#allocation3 + $0x58] sm:$0xff]
      %v811 = vld [vmem:[#allocation3 + $0x60] sm:$0xf]
      %v812 = vld [vmem:[#allocation3 + $0x68] sm:$0xf]
      %v813 = vld [vmem:[#allocation3 + $0x70] sm:$0xf]
      %v814 = vld [vmem:[%s4] sm:$0xf]
      %816 = vset.pattern.permute.xlu0 0
      %817 = vperm.xlu0 %816, %v814
      %v818 = vpop.permute.xlu0 %817
      %v821 = vsel %vm449, %v798, 0
      %v824 = vsel %vm453, %v811, 0
      %v827 = vsel %vm453, %v812, 0
      %v830 = vsel %vm453, %v813, 0
      %832 = vmatprep.subr.mxu0 %v800
      %833 = vmatpush1.msra.mxu0 %v799
      %834 = vmatprep.subr.mxu0 %v803
      %835 = vmatpush1.msra.mxu0 %v802
      %836 = vmatprep.subr.mxu0 %v806
      %837 = vmatpush1.msra.mxu0 %v805
      %838 = vmatprep.subr.mxu0 %v809
      %839 = vmatpush1.msra.mxu0 %v808
      %840 = vmatprep.subr.mxu0 %v827
      %841 = vmatpush1.msra.mxu0 %v824
      %842 = vmatprep.subr.mxu0 0.0
      %843 = vmatpush1.msra.mxu0 0.0
      %844 = vmatprep.subr.mxu0 0.0
      %845 = vmatpush1.msra.mxu0 0.0
      %846 = vmatprep.subr.mxu0 0.0
      %847 = vmatpush1.msra.mxu0 0.0
      %848 = vmatprep.subr.mxu0 0.0
      %849 = vmatpush1.msra.mxu0 0.0
      %850 = vmatprep.subr.mxu0 0.0
      %851 = vmatpush1.msra.mxu0 0.0
      %852 = vmatprep.subr.mxu0 0.0
      %853 = vmatpush1.msra.mxu0 0.0
      %854 = vmatprep.subr.mxu0 0.0
      %855 = vmatpush1.msra.mxu0 0.0
      %856 = vmatprep.subr.mxu0 0.0
      %857 = vmatpush1.msra.mxu0 0.0
      %858 = vmatprep.subr.mxu0 0.0
      %859 = vmatpush1.msra.mxu0 0.0
      %860 = vmatprep.subr.mxu0 0.0
      %861 = vmatpush1.msra.mxu0 0.0
      %862 = vmatprep.subr.mxu0 0.0
      %863 = vmatpush1.msra.mxu0 0.0
      %864 = vmatprep.subr.mxu0 0.0
      %865 = vmatpush1.msra.mxu0 0.0
      %866 = vmatprep.subr.mxu0 0.0
      %867 = vmatpush1.msra.mxu0 0.0
      %868 = vmatprep.subr.mxu0 0.0
      %869 = vmatpush1.msra.mxu0 0.0
      %870 = vmatprep.subr.mxu0 0.0
      %871 = vmatpush1.msra.mxu0 0.0
      %872 = vmatprep.subr.mxu0 0.0
      %873 = vmatpush1.msra.mxu0 0.0
      %874 = vmatprep.subr.mxu0 0.0
      %875 = vmatpush1.msra.mxu0 0.0
      %876 = vmatprep.subr.mxu0 0.0
      %877 = vmatpush1.msra.mxu0 0.0
      %878 = vmatprep.subr.mxu0 0.0
      %879 = vmatpush1.msra.mxu0 0.0
      %880 = vmatprep.subr.mxu0 0.0
      %881 = vmatpush1.msra.mxu0 0.0
      %882 = vmatprep.subr.mxu0 0.0
      %883 = vmatpush1.msra.mxu0 0.0
      %884 = vmatprep.subr.mxu0 0.0
      %885 = vmatpush1.msra.mxu0 0.0
      %886 = vmatprep.subr.mxu0 0.0
      %887 = vmatpush1.msra.mxu0 0.0
      %888 = vmatprep.subr.mxu0 0.0
      %889 = vmatpush1.msra.mxu0 0.0
      %890 = vmatprep.subr.mxu0 0.0
      %891 = vmatpush1.msra.mxu0 0.0
      %892 = vmatprep.subr.mxu0 0.0
      %893 = vmatpush1.msra.mxu0 0.0
      %894 = vmatprep.subr.mxu0 0.0
      %895 = vmatpush1.msra.mxu0 0.0
      %896 = vmatprep.mubr.f32.mxu0 0.0
      %897 = vmatmul.mubr.f32.gmra.mrb[0].mxu0 %v821
      %v898 = vpop.f32.mrb[0].mxu0
      %v899 = vadd.f32 %v818, %v898
      %v900 = vpop.f32.mrb[0].mxu0
      %v901 = vadd.f32 %v818, %v900
      %902 = vdwg.mxu0
      %903 = vmatprep.subr.mxu0 0.0
      %904 = vmatpush1.msra.mxu0 %v801
      %905 = vmatprep.subr.mxu0 0.0
      %906 = vmatpush1.msra.mxu0 %v804
      %907 = vmatprep.subr.mxu0 0.0
      %908 = vmatpush1.msra.mxu0 %v807
      %909 = vmatprep.subr.mxu0 0.0
      %910 = vmatpush1.msra.mxu0 %v810
      %911 = vmatprep.subr.mxu0 0.0
      %912 = vmatpush1.msra.mxu0 %v830
      %913 = vmatprep.subr.mxu0 0.0
      %914 = vmatpush1.msra.mxu0 0.0
      %915 = vmatprep.subr.mxu0 0.0
      %916 = vmatpush1.msra.mxu0 0.0
      %917 = vmatprep.subr.mxu0 0.0
      %918 = vmatpush1.msra.mxu0 0.0
      %919 = vmatprep.subr.mxu0 0.0
      %920 = vmatpush1.msra.mxu0 0.0
      %921 = vmatprep.subr.mxu0 0.0
      %922 = vmatpush1.msra.mxu0 0.0
      %923 = vmatprep.subr.mxu0 0.0
      %924 = vmatpush1.msra.mxu0 0.0
      %925 = vmatprep.subr.mxu0 0.0
      %926 = vmatpush1.msra.mxu0 0.0
      %927 = vmatprep.subr.mxu0 0.0
      %928 = vmatpush1.msra.mxu0 0.0
      %929 = vmatprep.subr.mxu0 0.0
      %930 = vmatpush1.msra.mxu0 0.0
      %931 = vmatprep.subr.mxu0 0.0
      %932 = vmatpush1.msra.mxu0 0.0
      %933 = vmatprep.subr.mxu0 0.0
      %934 = vmatpush1.msra.mxu0 0.0
      %935 = vmatprep.subr.mxu0 0.0
      %936 = vmatpush1.msra.mxu0 0.0
      %937 = vmatprep.subr.mxu0 0.0
      %938 = vmatpush1.msra.mxu0 0.0
      %939 = vmatprep.subr.mxu0 0.0
      %940 = vmatpush1.msra.mxu0 0.0
      %941 = vmatprep.subr.mxu0 0.0
      %942 = vmatpush1.msra.mxu0 0.0
      %943 = vmatprep.subr.mxu0 0.0
      %944 = vmatpush1.msra.mxu0 0.0
      %945 = vmatprep.subr.mxu0 0.0
      %946 = vmatpush1.msra.mxu0 0.0
      %947 = vmatprep.subr.mxu0 0.0
      %948 = vmatpush1.msra.mxu0 0.0
      %949 = vmatprep.subr.mxu0 0.0
      %950 = vmatpush1.msra.mxu0 0.0
      %951 = vmatprep.subr.mxu0 0.0
      %952 = vmatpush1.msra.mxu0 0.0
      %953 = vmatprep.subr.mxu0 0.0
      %954 = vmatpush1.msra.mxu0 0.0
      %955 = vmatprep.subr.mxu0 0.0
      %956 = vmatpush1.msra.mxu0 0.0
      %957 = vmatprep.subr.mxu0 0.0
      %958 = vmatpush1.msra.mxu0 0.0
      %959 = vmatprep.subr.mxu0 0.0
      %960 = vmatpush1.msra.mxu0 0.0
      %961 = vmatprep.subr.mxu0 0.0
      %962 = vmatpush1.msra.mxu0 0.0
      %963 = vmatprep.subr.mxu0 0.0
      %964 = vmatpush1.msra.mxu0 0.0
      %965 = vmatprep.subr.mxu0 0.0
      %966 = vmatpush1.msra.mxu0 0.0
      %967 = vmatprep.mubr.f32.mxu0 0.0
      %968 = vmatmul.mubr.f32.gmra.mrb[0].mxu0 %v821
      %v969 = vpop.f32.mrb[0].mxu0
      %v970 = vadd.f32 %v818, %v969
      %v971 = vpop.f32.mrb[0].mxu0
      %972 = vdwg.mxu0
      %973 = vrot.lane.b32.xlu0 %v261, 90
      %v974 = vpop.permute.xlu0 %973
      %975 = vrot.lane.b32.xlu0 %v262, 90
      %v976 = vpop.permute.xlu0 %975
      %v977 = vsel %vm363, %v358, %v974
      %v978 = vsel %vm363, %v974, %v362
      %v979 = vsel %vm363, %v362, %v976
      %v983 = vadd.f32 %v899, %v977
      %v984 = vadd.f32 %v901, %v978
      %v985 = vadd.f32 %v970, %v979
      %v986 = vmax.f32 %v983, 0.0
      %v987 = vmax.f32 %v984, 0.0
      %v988 = vmax.f32 %v985, 0.0
      %v991 = vcombine.low %v986, %v987
      %993 = vst [vmem:[%s251] sm:$0xff] %v991
      %994 = vst [vmem:[%s251 + $0x8] sm:$0xf] %v988
      %p995 = scmp.lt.s32.totalorder %s17, 1
      %s996 = scalar_select %p995, %s17, 1
      %s997 = smul.addr %s996, 3
      %s998 = smul.addr %s997, 4
      %s999 = scalar_lea.vmem %s6, %s998
      // Predicated region
      $region45: #{trans_spatial_residual_block.1} parent=43 // pred_check
        %p1000 = pneg %p166
      $region46: #{trans_spatial_residual_block.1} parent=43 // pred_check_branch
        %1002 = sbr.rel (%p1000) target = $region48
      $region47: #{trans_spatial_residual_block.1} parent=43 // pred_region
        _
      $region48: #{trans_spatial_residual_block.1} parent=43 // pred_fallthru
        _
    $region44: #{trans_spatial_residual_block.1} parent=5 // pred_fallthru
      _
    %p1003 = scmp.le.s32.totalorder 2, %s12
    // Predicated region
    $region49: #{trans_spatial_residual_block.1} parent=5 // pred_check
      %p1004 = pneg %p1003
    $region50: #{trans_spatial_residual_block.1} parent=5 // pred_check_branch
      %1006 = sbr.rel (%p1004) target = $region52
    $region51: #{trans_spatial_residual_block.1} parent=5 // pred_region
      %s1007 = ssub.s32 %s12, 2
      // Predicated region
      $region53: #{trans_spatial_residual_block.1} parent=51 // pred_check
        %p1008 = pneg %p172
      $region54: #{trans_spatial_residual_block.1} parent=51 // pred_check_branch
        %1010 = sbr.rel (%p1008) target = $region56
      $region55: #{trans_spatial_residual_block.1} parent=51 // pred_region
        %p1011 = scmp.lt.s32.totalorder %s18, 1
        %s1012 = scalar_select %p1011, %s18, 1
        %s1013 = smul.addr %s1012, 3
        %s1014 = smul.addr %s1013, 4
        %s1015 = scalar_lea.vmem %s6, %s1014
      $region56: #{trans_spatial_residual_block.1} parent=51 // pred_fallthru
        _
    $region52: #{trans_spatial_residual_block.1} parent=5 // pred_fallthru
      _
  $region6: #{trans_spatial_residual_block.1} parent=0 // loop_footer
    %s16 = sadd.s32 1, %s12
  $region7: #{trans_spatial_residual_block.1} parent=0 // loop_footer_branch
    %11 = sbr.rel target = $region3
  $region8: #{trans_spatial_residual_block.1} parent=0 // loop_exit
    _

</llo_original>
